<compile_context>
chip_gen: v7x
topology: tpu7x:2x2x1
jax: 0.10.0
libtpu: 0.0.40
codegen_flags: <defaults>
</compile_context>

<pallas_src>
import functools
import math

import jax
import jax.numpy as jnp
from jax import lax
from jax.experimental import pallas as pl
from jax.experimental.pallas import tpu as pltpu


def _upsample1d_kernel(x_ref, w_ref, halo_ref, b_ref, out_ref):
    # x_ref:    (1, TL, C)     input tile, native dtype
    # w_ref:    (C, 4C)        stacked weights [W1 | W2 | W3 | W0], native dtype
    # halo_ref: (1, 1, 2, C)   row before tile (index 0) and row after tile (index 1)
    # b_ref:    (1, 2C)        bias tiled twice [b | b]
    # out_ref:  (1, TL, 2C)    packed output [even | odd] per input row
    x = x_ref[0]                  # (TL, C)  -- fed to the MXU in native dtype
    w = w_ref[...]                # (C, 4C)
    tl, cdim = x.shape

    # One wide MXU matmul per tile, f32 accumulation.
    y = jnp.dot(x, w, preferred_element_type=jnp.float32)            # (TL, 4C)

    direct = y[:, 0 * cdim:2 * cdim]   # [x[m]@W1 | x[m]@W2]  -> even/odd direct terms
    s3 = y[:, 2 * cdim:3 * cdim]       # x[m] @ W3            -> even, needs the m-1 row
    s0 = y[:, 3 * cdim:4 * cdim]       # x[m] @ W0            -> odd,  needs the m+1 row

    # Cross-tile boundary rows: one tiny (2, C) x (C, 4C) matmul.
    halo = halo_ref[0, 0]                                             # (2, C)
    bnd = jnp.dot(halo, w, preferred_element_type=jnp.float32)        # (2, 4C)
    bnd_prev = bnd[0:1, 2 * cdim:3 * cdim]                            # x[start-1]  @ W3, (1, C)
    bnd_next = bnd[1:2, 3 * cdim:4 * cdim]                            # x[start+TL] @ W0, (1, C)

    # Shift result slabs by one row on the XLU; patch the tile-boundary row.
    row = lax.broadcasted_iota(jnp.int32, (tl, cdim), 0)
    prev = jnp.where(row == 0, bnd_prev, pltpu.roll(s3, 1, 0))             # -> x[m-1] @ W3
    nxt = jnp.where(row == tl - 1, bnd_next, pltpu.roll(s0, tl - 1, 0))    # -> x[m+1] @ W0
    shifted = jnp.concatenate([prev, nxt], axis=-1)                        # (TL, 2C)

    bias2 = b_ref[...].astype(jnp.float32)                                 # (1, 2C)

    # f32 epilogue; single narrowing cast at the (full-width, unmasked) store.
    out_ref[0] = (direct + shifted + bias2).astype(out_ref.dtype)


@functools.partial(jax.jit, static_argnames=("tile_l",))
def upsample1d(x_ncl, weight, bias, *, tile_l=None):
    """ConvTranspose1d(dim, dim, kernel_size=4, stride=2, padding=1).

    x_ncl:  (B, C, L)
    weight: (C_in, C_out, 4)   (torch ConvTranspose1d layout)
    bias:   (C,)
    returns (B, C, 2L)
    """
    B, C, L = x_ncl.shape
    dtype = x_ncl.dtype

    if tile_l is None:
        tile_l = L if L <= 512 else 512
    tile_l = int(tile_l)
    n_tiles = (L + tile_l - 1) // tile_l
    Lp = n_tiles * tile_l
    if n_tiles > 1 and tile_l % 8 != 0:
        raise ValueError("tile_l must be a multiple of 8 when the length axis is tiled")

    # NCL -> NLC (channels on lanes); zero-pad length to a multiple of tile_l.
    x_nlc = jnp.transpose(x_ncl, (0, 2, 1))                          # (B, L, C)
    if Lp != L:
        x_nlc = jnp.pad(x_nlc, ((0, 0), (0, Lp - L), (0, 0)))

    # Stacked RHS [W1 | W2 | W3 | W0] -> (C, 4C), cast to activation dtype (native-dtype matmul).
    w_kcc = jnp.transpose(weight, (2, 0, 1)).astype(dtype)           # (4, C_in, C_out)
    w_stacked = jnp.concatenate([w_kcc[1], w_kcc[2], w_kcc[3], w_kcc[0]], axis=1)  # (C, 4C)
    b_2d = jnp.concatenate([bias, bias]).reshape(1, 2 * C)           # (1, 2C)

    # Per-tile halo rows: halo[:, t, 0] = x[t*TL - 1] (zero at t=0),
    #                     halo[:, t, 1] = x[(t+1)*TL] (zero at t=n_tiles-1).
    zero_row = jnp.zeros((B, 1, C), dtype=dtype)
    tile_last = x_nlc[:, tile_l - 1::tile_l, :]                      # (B, n_tiles, C)
    tile_first = x_nlc[:, ::tile_l, :]                               # (B, n_tiles, C)
    prev_rows = jnp.concatenate([zero_row, tile_last[:, :-1, :]], axis=1)
    next_rows = jnp.concatenate([tile_first[:, 1:, :], zero_row], axis=1)
    halo = jnp.stack([prev_rows, next_rows], axis=2)                 # (B, n_tiles, 2, C)

    # VMEM budget: double-buffered in/out tiles + weights + f32 temporaries, with headroom.
    itemsize = jnp.dtype(dtype).itemsize
    tile_bytes = tile_l * C * itemsize
    need = (2 * tile_bytes                 # x tile, double-buffered
            + 2 * 2 * tile_bytes           # packed out tile, double-buffered
            + 2 * 4 * C * C * itemsize     # stacked weights
            + 4 * tile_l * 4 * C * 4       # f32 matmul result + shifted slabs + epilogue
            + (1 << 20))
    vmem_limit = int(min(max(2 * need, 16 << 20), 48 << 20))

    out_packed = pl.pallas_call(
        _upsample1d_kernel,
        out_shape=jax.ShapeDtypeStruct((B, Lp, 2 * C), dtype),
        grid_spec=pltpu.PrefetchScalarGridSpec(
            num_scalar_prefetch=0,
            grid=(B, n_tiles),
            in_specs=[
                pl.BlockSpec((1, tile_l, C), lambda b, t: (b, t, 0)),    # x tile
                pl.BlockSpec((C, 4 * C), lambda b, t: (0, 0)),           # stacked weights
                pl.BlockSpec((1, 1, 2, C), lambda b, t: (b, t, 0, 0)),   # halo rows
                pl.BlockSpec((1, 2 * C), lambda b, t: (0, 0)),           # bias (tiled twice)
            ],
            out_specs=pl.BlockSpec((1, tile_l, 2 * C), lambda b, t: (b, t, 0)),
        ),
        compiler_params=pltpu.CompilerParams(
            dimension_semantics=("parallel", "parallel"),
            vmem_limit_bytes=vmem_limit,
        ),
    )(x_nlc, w_stacked, halo, b_2d)

    # Drop length padding; fold the even/odd interleave into the NCL transpose.
    planes = out_packed[:, :L, :].reshape(B, L, 2, C)                # (B, L, 2, C)
    return jnp.transpose(planes, (0, 3, 1, 2)).reshape(B, C, 2 * L)  # (B, C, 2L)


def _reference_conv_transpose1d(x_ncl, weight, bias, stride=2, padding=1):
    # ConvTranspose1d == dilated-input cross-correlation with flipped, (in/out)-swapped weights.
    K = weight.shape[-1]
    w_oik = jnp.transpose(weight, (1, 0, 2))[:, :, ::-1]             # (O, I, K), kernel flipped
    pad = K - 1 - padding
    out = lax.conv_general_dilated(
        x_ncl, w_oik,
        window_strides=(1,),
        padding=[(pad, pad)],
        lhs_dilation=(stride,),
        rhs_dilation=(1,),
        dimension_numbers=("NCH", "OIH", "NCH"),
    )
    return out + bias[None, :, None]


if __name__ == "__main__":
    key = jax.random.PRNGKey(0)
    kx, kw, kb, kx2 = jax.random.split(key, 4)

    B, C, L, K = 2, 8, 16, 4
    bound = 1.0 / math.sqrt(C * K)

    x = jax.random.normal(kx, (B, C, L), dtype=jnp.float32)
    weight = jax.random.uniform(kw, (C, C, K), jnp.float32, -bound, bound)
    bias = jax.random.uniform(kb, (C,), jnp.float32, -bound, bound)

    # 1) single-tile path (tile_l == L), f32
    out = jax.block_until_ready(upsample1d(x, weight, bias))
    ref = _reference_conv_transpose1d(x, weight, bias)
    assert out.shape == (B, C, 2 * L), out.shape
    assert jnp.allclose(out, ref, atol=1e-5, rtol=1e-5), float(jnp.max(jnp.abs(out - ref)))

    # 2) multi-tile path with halo rows + length padding (L=12 not a multiple of tile_l=8)
    L2 = 12
    x2 = jax.random.normal(kx2, (B, C, L2), dtype=jnp.float32)
    out2 = jax.block_until_ready(upsample1d(x2, weight, bias, tile_l=8))
    ref2 = _reference_conv_transpose1d(x2, weight, bias)
    assert out2.shape == (B, C, 2 * L2), out2.shape
    assert jnp.allclose(out2, ref2, atol=1e-5, rtol=1e-5), float(jnp.max(jnp.abs(out2 - ref2)))

    # 3) bf16 activations/weights fed straight to the MXU (f32 accumulation), loose tolerance
    xb = x.astype(jnp.bfloat16)
    wb = weight.astype(jnp.bfloat16)
    bb = bias.astype(jnp.bfloat16)
    outb = jax.block_until_ready(upsample1d(xb, wb, bb))
    refb = _reference_conv_transpose1d(xb.astype(jnp.float32), wb.astype(jnp.float32),
                                       bb.astype(jnp.float32))
    assert outb.shape == (B, C, 2 * L), outb.shape
    assert jnp.allclose(outb.astype(jnp.float32), refb, atol=5e-2, rtol=5e-2)

    print("KERNEL_OK")
</pallas_src>

<mosaic_0001>
module attributes {stable_mosaic.version = 11 : i64} {
  func.func @_upsample1d_kernel(%arg0: i32, %arg1: i32, %arg2: memref<1x16x8xf32, #tpu.memory_space<vmem>>, %arg3: memref<8x32xf32, #tpu.memory_space<vmem>>, %arg4: memref<1x1x2x8xf32, #tpu.memory_space<vmem>>, %arg5: memref<1x16xf32, #tpu.memory_space<vmem>>, %arg6: memref<1x16x16xf32, #tpu.memory_space<vmem>>) attributes {dimension_semantics = [#tpu.dimension_semantics<parallel>, #tpu.dimension_semantics<parallel>], iteration_bounds = array<i64: 2, 1>, scalar_prefetch = 0 : i64, scratch_operands = 0 : i64, tpu.core_type = #tpu.core_type<tc>, window_params = [{transform_indices = @transform_0, window_bounds = array<i64: 1, 16, 8>}, {pipeline_mode = #tpu.pipeline_mode<synchronous>, transform_indices = @transform_1, window_bounds = array<i64: 8, 32>}, {transform_indices = @transform_2, window_bounds = array<i64: 1, 1, 2, 8>}, {pipeline_mode = #tpu.pipeline_mode<synchronous>, transform_indices = @transform_3, window_bounds = array<i64: 1, 16>}, {transform_indices = @transform_4, window_bounds = array<i64: 1, 16, 16>}]} {
    %c0 = arith.constant 0 : index
    %c0_0 = arith.constant 0 : index
    %c0_1 = arith.constant 0 : index
    %0 = vector.load %arg2[%c0, %c0_0, %c0_1] : memref<1x16x8xf32, #tpu.memory_space<vmem>>, vector<1x16x8xf32>
    %1 = vector.shape_cast %0 : vector<1x16x8xf32> to vector<16x8xf32>
    %c0_2 = arith.constant 0 : index
    %c0_3 = arith.constant 0 : index
    %2 = vector.load %arg3[%c0_2, %c0_3] : memref<8x32xf32, #tpu.memory_space<vmem>>, vector<8x32xf32>
    %cst = arith.constant dense<0.000000e+00> : vector<16x32xf32>
    %3 = tpu.matmul %1, %2, %cst {dimension_numbers = #tpu.dot_dimension_numbers<[1], [0], [0], [1], [0, 0, 1, 1], [], []>} : vector<16x8xf32>, vector<8x32xf32>, vector<16x32xf32> -> vector<16x32xf32>
    %4 = vector.extract_strided_slice %3 {offsets = [0, 0], sizes = [16, 16], strides = [1, 1]} : vector<16x32xf32> to vector<16x16xf32>
    %5 = vector.extract_strided_slice %3 {offsets = [0, 16], sizes = [16, 8], strides = [1, 1]} : vector<16x32xf32> to vector<16x8xf32>
    %6 = vector.extract_strided_slice %3 {offsets = [0, 24], sizes = [16, 8], strides = [1, 1]} : vector<16x32xf32> to vector<16x8xf32>
    %c0_4 = arith.constant 0 : index
    %c0_5 = arith.constant 0 : index
    %c0_6 = arith.constant 0 : index
    %c0_7 = arith.constant 0 : index
    %7 = vector.load %arg4[%c0_4, %c0_5, %c0_6, %c0_7] : memref<1x1x2x8xf32, #tpu.memory_space<vmem>>, vector<1x1x2x8xf32>
    %8 = vector.shape_cast %7 : vector<1x1x2x8xf32> to vector<2x8xf32>
    %cst_8 = arith.constant dense<0.000000e+00> : vector<2x32xf32>
    %9 = tpu.matmul %8, %2, %cst_8 {dimension_numbers = #tpu.dot_dimension_numbers<[1], [0], [0], [1], [0, 0, 1, 1], [], []>} : vector<2x8xf32>, vector<8x32xf32>, vector<2x32xf32> -> vector<2x32xf32>
    %10 = vector.extract_strided_slice %9 {offsets = [0, 16], sizes = [1, 8], strides = [1, 1]} : vector<2x32xf32> to vector<1x8xf32>
    %11 = vector.extract_strided_slice %9 {offsets = [1, 24], sizes = [1, 8], strides = [1, 1]} : vector<2x32xf32> to vector<1x8xf32>
    %12 = tpu.iota {dimensions = array<i32: 0>} : vector<16x8xi32>
    %c0_i32 = arith.constant 0 : i32
    %13 = vector.broadcast %c0_i32 : i32 to vector<16x8xi32>
    %14 = arith.cmpi eq, %12, %13 : vector<16x8xi32>
    %c1_i32 = arith.constant 1 : i32
    %15 = tpu.dynamic_rotate %5 by %c1_i32 dim 0 : vector<16x8xf32>, i32 -> vector<16x8xf32>
    %16 = vector.shape_cast %10 : vector<1x8xf32> to vector<1x8xf32>
    %17 = vector.broadcast %16 : vector<1x8xf32> to vector<16x8xf32>
    %18 = arith.select %14, %17, %15 : vector<16x8xi1>, vector<16x8xf32>
    %c15_i32 = arith.constant 15 : i32
    %19 = vector.broadcast %c15_i32 : i32 to vector<16x8xi32>
    %20 = arith.cmpi eq, %12, %19 : vector<16x8xi32>
    %c15_i32_9 = arith.constant 15 : i32
    %21 = tpu.dynamic_rotate %6 by %c15_i32_9 dim 0 : vector<16x8xf32>, i32 -> vector<16x8xf32>
    %22 = vector.shape_cast %11 : vector<1x8xf32> to vector<1x8xf32>
    %23 = vector.broadcast %22 : vector<1x8xf32> to vector<16x8xf32>
    %24 = arith.select %20, %23, %21 : vector<16x8xi1>, vector<16x8xf32>
    %25 = tpu.concatenate %18, %24 in 1 : vector<16x8xf32>, vector<16x8xf32> -> vector<16x16xf32>
    %c0_10 = arith.constant 0 : index
    %c0_11 = arith.constant 0 : index
    %26 = vector.load %arg5[%c0_10, %c0_11] : memref<1x16xf32, #tpu.memory_space<vmem>>, vector<1x16xf32>
    %27 = arith.addf %4, %25 : vector<16x16xf32>
    %28 = vector.broadcast %26 : vector<1x16xf32> to vector<16x16xf32>
    %29 = arith.addf %27, %28 : vector<16x16xf32>
    %c0_12 = arith.constant 0 : index
    %c0_13 = arith.constant 0 : index
    %c0_14 = arith.constant 0 : index
    %30 = vector.load %arg6[%c0_12, %c0_13, %c0_14] : memref<1x16x16xf32, #tpu.memory_space<vmem>>, vector<1x16x16xf32>
    %31 = vector.shape_cast %30 : vector<1x16x16xf32> to vector<16x16xf32>
    %32 = vector.shape_cast %29 : vector<16x16xf32> to vector<1x16x16xf32>
    tpu.vector_store %arg6[%c0_12, %c0_13, %c0_14], %32 {strides = array<i32>} : memref<1x16x16xf32, #tpu.memory_space<vmem>>, vector<1x16x16xf32>,
    return
  }
  func.func @transform_0(%arg0: i32, %arg1: i32) -> (i32, i32, i32) {
    %c0_i32 = arith.constant 0 : i32
    %c0_i32_0 = arith.constant 0 : i32
    return %arg0, %arg1, %c0_i32 : i32, i32, i32
  }
  func.func @transform_1(%arg0: i32, %arg1: i32) -> (i32, i32) {
    %c0_i32 = arith.constant 0 : i32
    %c0_i32_0 = arith.constant 0 : i32
    %c0_i32_1 = arith.constant 0 : i32
    return %c0_i32, %c0_i32_0 : i32, i32
  }
  func.func @transform_2(%arg0: i32, %arg1: i32) -> (i32, i32, i32, i32) {
    %c0_i32 = arith.constant 0 : i32
    %c0_i32_0 = arith.constant 0 : i32
    %c0_i32_1 = arith.constant 0 : i32
    return %arg0, %arg1, %c0_i32, %c0_i32_0 : i32, i32, i32, i32
  }
  func.func @transform_3(%arg0: i32, %arg1: i32) -> (i32, i32) {
    %c0_i32 = arith.constant 0 : i32
    %c0_i32_0 = arith.constant 0 : i32
    %c0_i32_1 = arith.constant 0 : i32
    return %c0_i32, %c0_i32_0 : i32, i32
  }
  func.func @transform_4(%arg0: i32, %arg1: i32) -> (i32, i32, i32) {
    %c0_i32 = arith.constant 0 : i32
    %c0_i32_0 = arith.constant 0 : i32
    return %arg0, %arg1, %c0_i32 : i32, i32, i32
  }
}

</mosaic_0001>

<llo_original>
// kernel: upsample1d.1
$region0: #{upsample1d.1}
  #allocation0 [shape = 'u32[]', space=smem, size = 0x4, offset = 0x4, fixed_abs, tag = 'smem constant byte address 0x4 - core index']
  #allocation1 [shape = 'u32[144,128]{1,0:T(1,128)}', space=vmem, size = 0x12000, scoped, tag = 'internal scratch']
  %s0 = inlined_call_operand.vmem [shape: f32[2,16,8], index: 0, kind: input, shape index: {}]
  %s1 = inlined_call_operand.vmem [shape: f32[8,32], index: 1, kind: input, shape index: {}]
  %s2 = inlined_call_operand.vmem [shape: f32[2,1,2,8], index: 2, kind: input, shape index: {}]
  %s3 = inlined_call_operand.vmem [shape: f32[1,16], index: 3, kind: input, shape index: {}]
  %s4 = inlined_call_operand.vmem [shape: f32[2,16,16], index: 4, kind: output, shape index: {}]
  %s5 = sld [smem:[#allocation0]]
  $region49: #{upsample1d.1} parent=0
    _
  %s7 = ssub.s32 1, %s5
  %s8 = scalar_select 0, %s7, %s5
  loop: start=0, step=1, limit=4
  $region2: #{upsample1d.1} parent=0 // loop_pre_header
    _
  $region3: #{upsample1d.1} parent=0 // loop_header
    %s10 = sphi 0, %s14
    %p11 = scmp.ge.s32.totalorder %s10, 4
    %s17 = sphi 0, %s29
    %s18 = sphi 0, %s25
    %s19 = sphi 0, %s17
    %s20 = sphi 0, %s18
    %s21 = sphi 0, %s19
    %s22 = sphi 0, %s20
    %s34 = sphi 0, %s36
    %s37 = sphi 0, %s34
    %s38 = sphi 0, %s37
    %s54 = sphi 0, %s38
    %s58 = sphi 0, %s58
    %s60 = sphi 0, %s58
    %s61 = sphi 0, %s60
    %s75 = sphi 0, %s61
    %s83 = sphi 0, %s85
    %s86 = sphi 0, %s83
    %s87 = sphi 0, %s86
    %s103 = sphi 0, %s87
    %s107 = sphi 0, %s107
    %s109 = sphi 0, %s107
    %s110 = sphi 0, %s109
    %s124 = sphi 0, %s110
    %s132 = sphi 0, %s134
    %s135 = sphi 0, %s132
    %s136 = sphi 0, %s135
    %s152 = sphi 0, %s136
  $region4: #{upsample1d.1} parent=0 // loop_header_branch
    %13 = sbr.rel (%p11) target = $region8
  $region5: #{upsample1d.1} parent=0 // loop_body
    %s15 = ssub.s32 %s10, 1
    %s16 = ssub.s32 %s10, 2
    %s23 = sadd.s32 1, %s18
    %p24 = scmp.ge.s32.totalorder %s23, 1
    %s25 = scalar_select %p24, 0, %s23
    %s26 = sadd.s32 1, %s17
    %s27 = scalar_select %p24, %s26, %s17
    %p28 = scmp.ge.s32.totalorder %s27, 2
    %s29 = scalar_select %p28, 0, %s27
    %s30 = ssub.s32 %s17, %s29
    %s31 = ssub.s32 %s18, %s25
    %s32 = sor.u32 %s30, %s31
    %p33 = scmp.eq.s32.totalorder %s32, 0
    %s35 = sadd.s32 %s34, 1
    %s36 = scalar_select %p33, %s34, %s35
    %p39 = pneg %p33
    %p40 = scmp.eq.s32.totalorder %s10, 1
    %p41 = por %p39, %p40
    %p42 = scmp.ne.s32.totalorder %s34, %s37
    %p43 = scmp.eq.s32.totalorder %s10, 0
    %p44 = por %p42, %p43
    %p45 = scmp.ne.s32.totalorder %s34, %s37
    %p46 = scmp.eq.s32.totalorder %s15, 1
    %p47 = por %p45, %p46
    %p48 = scmp.ne.s32.totalorder %s37, %s38
    %p49 = scmp.eq.s32.totalorder %s15, 0
    %p50 = por %p48, %p49
    %p51 = scmp.ne.s32.totalorder %s37, %s38
    %p52 = scmp.eq.s32.totalorder %s16, 1
    %p53 = por %p51, %p52
    %p55 = scmp.ne.s32.totalorder %s38, %s54
    %p56 = scmp.eq.s32.totalorder %s16, 0
    %p57 = por %p55, %p56
    %s59 = sadd.s32 %s58, 1
    %p62 = scmp.eq.s32.totalorder %s10, 1
    %p63 = scmp.ne.s32.totalorder %s58, %s60
    %p64 = scmp.eq.s32.totalorder %s10, 0
    %p65 = por %p63, %p64
    %p66 = scmp.ne.s32.totalorder %s58, %s60
    %p67 = scmp.eq.s32.totalorder %s15, 1
    %p68 = por %p66, %p67
    %p69 = scmp.ne.s32.totalorder %s60, %s61
    %p70 = scmp.eq.s32.totalorder %s15, 0
    %p71 = por %p69, %p70
    %p72 = scmp.ne.s32.totalorder %s60, %s61
    %p73 = scmp.eq.s32.totalorder %s16, 1
    %p74 = por %p72, %p73
    %p76 = scmp.ne.s32.totalorder %s61, %s75
    %p77 = scmp.eq.s32.totalorder %s16, 0
    %p78 = por %p76, %p77
    %s79 = ssub.s32 %s17, %s29
    %s80 = ssub.s32 %s18, %s25
    %s81 = sor.u32 %s79, %s80
    %p82 = scmp.eq.s32.totalorder %s81, 0
    %s84 = sadd.s32 %s83, 1
    %s85 = scalar_select %p82, %s83, %s84
    %p88 = pneg %p82
    %p89 = scmp.eq.s32.totalorder %s10, 1
    %p90 = por %p88, %p89
    %p91 = scmp.ne.s32.totalorder %s83, %s86
    %p92 = scmp.eq.s32.totalorder %s10, 0
    %p93 = por %p91, %p92
    %p94 = scmp.ne.s32.totalorder %s83, %s86
    %p95 = scmp.eq.s32.totalorder %s15, 1
    %p96 = por %p94, %p95
    %p97 = scmp.ne.s32.totalorder %s86, %s87
    %p98 = scmp.eq.s32.totalorder %s15, 0
    %p99 = por %p97, %p98
    %p100 = scmp.ne.s32.totalorder %s86, %s87
    %p101 = scmp.eq.s32.totalorder %s16, 1
    %p102 = por %p100, %p101
    %p104 = scmp.ne.s32.totalorder %s87, %s103
    %p105 = scmp.eq.s32.totalorder %s16, 0
    %p106 = por %p104, %p105
    %s108 = sadd.s32 %s107, 1
    %p111 = scmp.eq.s32.totalorder %s10, 1
    %p112 = scmp.ne.s32.totalorder %s107, %s109
    %p113 = scmp.eq.s32.totalorder %s10, 0
    %p114 = por %p112, %p113
    %p115 = scmp.ne.s32.totalorder %s107, %s109
    %p116 = scmp.eq.s32.totalorder %s15, 1
    %p117 = por %p115, %p116
    %p118 = scmp.ne.s32.totalorder %s109, %s110
    %p119 = scmp.eq.s32.totalorder %s15, 0
    %p120 = por %p118, %p119
    %p121 = scmp.ne.s32.totalorder %s109, %s110
    %p122 = scmp.eq.s32.totalorder %s16, 1
    %p123 = por %p121, %p122
    %p125 = scmp.ne.s32.totalorder %s110, %s124
    %p126 = scmp.eq.s32.totalorder %s16, 0
    %p127 = por %p125, %p126
    %s128 = ssub.s32 %s17, %s29
    %s129 = ssub.s32 %s18, %s25
    %s130 = sor.u32 %s128, %s129
    %p131 = scmp.eq.s32.totalorder %s130, 0
    %s133 = sadd.s32 %s132, 1
    %s134 = scalar_select %p131, %s132, %s133
    %p137 = pneg %p131
    %p138 = scmp.eq.s32.totalorder %s10, 1
    %p139 = por %p137, %p138
    %p140 = scmp.ne.s32.totalorder %s132, %s135
    %p141 = scmp.eq.s32.totalorder %s10, 0
    %p142 = por %p140, %p141
    %p143 = scmp.ne.s32.totalorder %s132, %s135
    %p144 = scmp.eq.s32.totalorder %s15, 1
    %p145 = por %p143, %p144
    %p146 = scmp.ne.s32.totalorder %s135, %s136
    %p147 = scmp.eq.s32.totalorder %s15, 0
    %p148 = por %p146, %p147
    %p149 = scmp.ne.s32.totalorder %s135, %s136
    %p150 = scmp.eq.s32.totalorder %s16, 1
    %p151 = por %p149, %p150
    %p153 = scmp.ne.s32.totalorder %s136, %s152
    %p154 = scmp.eq.s32.totalorder %s16, 0
    %p155 = por %p153, %p154
    %p156 = scmp.le.s32.totalorder 1, %s10
    %p157 = scmp.lt.s32.totalorder %s10, 3
    %p158 = pnand %p156, %p157
    %p159 = pneg %p158
    // Predicated region
    $region9: #{upsample1d.1} parent=5 // pred_check
      _
    $region10: #{upsample1d.1} parent=5 // pred_check_branch
      %161 = sbr.rel (%p158) target = $region12
    $region11: #{upsample1d.1} parent=5 // pred_region
      %s162 = ssub.s32 %s10, 1
      // Predicated region
      $region13: #{upsample1d.1} parent=11 // pred_check
        %p163 = pneg %p71
      $region14: #{upsample1d.1} parent=11 // pred_check_branch
        %165 = sbr.rel (%p163) target = $region16
      $region15: #{upsample1d.1} parent=11 // pred_region
        _
      $region16: #{upsample1d.1} parent=11 // pred_fallthru
        _
      // Predicated region
      $region17: #{upsample1d.1} parent=11 // pred_check
        %p166 = pneg %p120
      $region18: #{upsample1d.1} parent=11 // pred_check_branch
        %168 = sbr.rel (%p166) target = $region20
      $region19: #{upsample1d.1} parent=11 // pred_region
        _
      $region20: #{upsample1d.1} parent=11 // pred_fallthru
        _
    $region12: #{upsample1d.1} parent=5 // pred_fallthru
      _
    %p169 = scmp.lt.s32.totalorder %s10, 2
    // Predicated region
    $region21: #{upsample1d.1} parent=5 // pred_check
      %p170 = pneg %p169
    $region22: #{upsample1d.1} parent=5 // pred_check_branch
      %172 = sbr.rel (%p170) target = $region24
    $region23: #{upsample1d.1} parent=5 // pred_region
      // Predicated region
      $region25: #{upsample1d.1} parent=23 // pred_check
        %p173 = pneg %p44
      $region26: #{upsample1d.1} parent=23 // pred_check_branch
        %175 = sbr.rel (%p173) target = $region28
      $region27: #{upsample1d.1} parent=23 // pred_region
        %s176 = smul.u32 2, %s18
        %p177 = scmp.lt.s32.totalorder %s17, 1
        %s178 = scalar_select %p177, %s17, 1
        %p179 = scmp.lt.s32.totalorder %s176, 1
        %s180 = scalar_select %p179, %s176, 1
        %s181 = smul.addr %s178, 2
        %s182 = sadd.s32 %s180, %s181
        %s183 = smul.addr %s182, 8
        %s184 = scalar_lea.vmem %s0, %s183
        %s185 = smul.u32 2, %s18
      $region28: #{upsample1d.1} parent=23 // pred_fallthru
        _
      // Predicated region
      $region29: #{upsample1d.1} parent=23 // pred_check
        %p186 = pneg %p93
      $region30: #{upsample1d.1} parent=23 // pred_check_branch
        %188 = sbr.rel (%p186) target = $region32
      $region31: #{upsample1d.1} parent=23 // pred_region
        %p189 = scmp.lt.s32.totalorder %s17, 1
        %s190 = scalar_select %p189, %s17, 1
        %p191 = scmp.lt.s32.totalorder %s18, 0
        %s192 = scalar_select %p191, %s18, 0
        %s193 = sadd.s32 %s192, %s190
        %s194 = smul.addr %s193, 2
        %s195 = scalar_lea.vmem %s2, %s194
      $region32: #{upsample1d.1} parent=23 // pred_fallthru
        _
    $region24: #{upsample1d.1} parent=5 // pred_fallthru
      _
    %p196 = scmp.le.s32.totalorder 1, %s10
    %p197 = scmp.lt.s32.totalorder %s10, 3
    %p198 = pnand %p196, %p197
    %p199 = pneg %p198
    // Predicated region
    $region33: #{upsample1d.1} parent=5 // pred_check
      _
    $region34: #{upsample1d.1} parent=5 // pred_check_branch
      %201 = sbr.rel (%p198) target = $region36
    $region35: #{upsample1d.1} parent=5 // pred_region
      %s202 = ssub.s32 %s10, 1
      %s203 = smul.u32 2, %s20
      %p204 = scmp.lt.s32.totalorder %s19, 1
      %s205 = scalar_select %p204, %s19, 1
      %p206 = scmp.lt.s32.totalorder %s203, 1
      %s207 = scalar_select %p206, %s203, 1
      %s208 = smul.addr %s205, 2
      %s209 = sadd.s32 %s207, %s208
      %s210 = smul.addr %s209, 8
      %s211 = scalar_lea.vmem %s0, %s210
      %p212 = pneg %p50
      %p213 = pneg %p47
      %p214 = pneg %p71
      %p215 = pneg %p68
      %p216 = scmp.lt.s32.totalorder %s19, 1
      %s217 = scalar_select %p216, %s19, 1
      %p218 = scmp.lt.s32.totalorder %s20, 0
      %s219 = scalar_select %p218, %s20, 0
      %s220 = sadd.s32 %s219, %s217
      %s221 = smul.addr %s220, 2
      %s222 = scalar_lea.vmem %s2, %s221
      %p223 = pneg %p99
      %p224 = pneg %p96
      %p225 = pneg %p120
      %p226 = pneg %p117
      %p227 = pneg %p148
      %p228 = pneg %p145
      %s229 = smul.u32 2, %s20
      %p230 = scmp.lt.s32.totalorder %s19, 1
      %s231 = scalar_select %p230, %s19, 1
      %p232 = scmp.lt.s32.totalorder %s229, 1
      %s233 = scalar_select %p232, %s229, 1
      %s234 = smul.addr %s231, 2
      %s235 = sadd.s32 %s233, %s234
      %s236 = smul.addr %s235, 8
      %s237 = scalar_lea.vmem %s4, %s236
      %s238 = smul.u32 2, %s20
      %p239 = scmp.lt.s32.totalorder %s19, 1
      %s240 = scalar_select %p239, %s19, 1
      %p241 = scmp.lt.s32.totalorder %s238, 1
      %s242 = scalar_select %p241, %s238, 1
      %s243 = smul.addr %s240, 2
      %s244 = sadd.s32 %s242, %s243
      %s245 = smul.addr %s244, 8
      %s246 = scalar_lea.vmem %s0, %s245
      %s247 = smul.u32 2, %s20
      %p248 = scmp.lt.s32.totalorder %s19, 1
      %s249 = scalar_select %p248, %s19, 1
      %p250 = scmp.lt.s32.totalorder %s20, 0
      %s251 = scalar_select %p250, %s20, 0
      %s252 = sadd.s32 %s251, %s249
      %s253 = smul.addr %s252, 2
      %s254 = scalar_lea.vmem %s2, %s253
      %s255 = smul.u32 2, %s20
      %p256 = scmp.lt.s32.totalorder %s19, 1
      %s257 = scalar_select %p256, %s19, 1
      %p258 = scmp.lt.s32.totalorder %s255, 1
      %s259 = scalar_select %p258, %s255, 1
      %s260 = smul.addr %s257, 2
      %s261 = sadd.s32 %s259, %s260
      %s262 = smul.addr %s261, 8
      %s263 = scalar_lea.vmem %s4, %s262
      %s264 = smul.u32 2, %s20
      %v265 = vld [vmem:[%s246] sm:$0xff]
      %v266 = vld [vmem:[%s246 + $0x8] sm:$0xff]
      %v267 = vld [vmem:[%s1] sm:$0xff]
      %vm268 = vcmask 64512
      %v270 = vsel %vm268, %v265, 0
      %v273 = vsel %vm268, %v266, 0
      %275 = vmatprep.subr.mxu0 0.0
      %276 = vmatpush1.msra.mxu0 %v267
      %277 = vmatprep.subr.mxu0 0.0
      %278 = vmatpush1.msra.mxu0 0.0
      %279 = vmatprep.subr.mxu0 0.0
      %280 = vmatpush1.msra.mxu0 0.0
      %281 = vmatprep.subr.mxu0 0.0
      %282 = vmatpush1.msra.mxu0 0.0
      %283 = vmatprep.subr.mxu0 0.0
      %284 = vmatpush1.msra.mxu0 0.0
      %285 = vmatprep.subr.mxu0 0.0
      %286 = vmatpush1.msra.mxu0 0.0
      %287 = vmatprep.subr.mxu0 0.0
      %288 = vmatpush1.msra.mxu0 0.0
      %289 = vmatprep.subr.mxu0 0.0
      %290 = vmatpush1.msra.mxu0 0.0
      %291 = vmatprep.subr.mxu0 0.0
      %292 = vmatpush1.msra.mxu0 0.0
      %293 = vmatprep.subr.mxu0 0.0
      %294 = vmatpush1.msra.mxu0 0.0
      %295 = vmatprep.subr.mxu0 0.0
      %296 = vmatpush1.msra.mxu0 0.0
      %297 = vmatprep.subr.mxu0 0.0
      %298 = vmatpush1.msra.mxu0 0.0
      %299 = vmatprep.subr.mxu0 0.0
      %300 = vmatpush1.msra.mxu0 0.0
      %301 = vmatprep.subr.mxu0 0.0
      %302 = vmatpush1.msra.mxu0 0.0
      %303 = vmatprep.subr.mxu0 0.0
      %304 = vmatpush1.msra.mxu0 0.0
      %305 = vmatprep.subr.mxu0 0.0
      %306 = vmatpush1.msra.mxu0 0.0
      %307 = vmatprep.subr.mxu0 0.0
      %308 = vmatpush1.msra.mxu0 0.0
      %309 = vmatprep.subr.mxu0 0.0
      %310 = vmatpush1.msra.mxu0 0.0
      %311 = vmatprep.subr.mxu0 0.0
      %312 = vmatpush1.msra.mxu0 0.0
      %313 = vmatprep.subr.mxu0 0.0
      %314 = vmatpush1.msra.mxu0 0.0
      %315 = vmatprep.subr.mxu0 0.0
      %316 = vmatpush1.msra.mxu0 0.0
      %317 = vmatprep.subr.mxu0 0.0
      %318 = vmatpush1.msra.mxu0 0.0
      %319 = vmatprep.subr.mxu0 0.0
      %320 = vmatpush1.msra.mxu0 0.0
      %321 = vmatprep.subr.mxu0 0.0
      %322 = vmatpush1.msra.mxu0 0.0
      %323 = vmatprep.subr.mxu0 0.0
      %324 = vmatpush1.msra.mxu0 0.0
      %325 = vmatprep.subr.mxu0 0.0
      %326 = vmatpush1.msra.mxu0 0.0
      %327 = vmatprep.subr.mxu0 0.0
      %328 = vmatpush1.msra.mxu0 0.0
      %329 = vmatprep.subr.mxu0 0.0
      %330 = vmatpush1.msra.mxu0 0.0
      %331 = vmatprep.subr.mxu0 0.0
      %332 = vmatpush1.msra.mxu0 0.0
      %333 = vmatprep.subr.mxu0 0.0
      %334 = vmatpush1.msra.mxu0 0.0
      %335 = vmatprep.subr.mxu0 0.0
      %336 = vmatpush1.msra.mxu0 0.0
      %337 = vmatprep.subr.mxu0 0.0
      %338 = vmatpush1.msra.mxu0 0.0
      %339 = vmatprep.mubr.f32.mxu0 0.0
      %340 = vmatmul.mubr.f32.gmra.mrb[0].mxu0 %v270
      %v341 = vpop.f32.mrb[0].mxu0
      %v342 = vadd.f32 0.0, %v341
      %v343 = vpop.f32.mrb[0].mxu0
      %344 = vmatprep.mubr.f32.mxu0 0.0
      %345 = vmatmul.mubr.f32.gmra.mrb[0].mxu0 %v273
      %v346 = vpop.f32.mrb[0].mxu0
      %v347 = vadd.f32 0.0, %v346
      %v348 = vpop.f32.mrb[0].mxu0
      %349 = vdwg.mxu0
      %v350 = vld [vmem:[%s254] sm:$0x3]
      %v352 = vsel %vm268, %v350, 0
      %354 = vmatprep.subr.mxu0 0.0
      %355 = vmatpush1.msra.mxu0 %v267
      %356 = vmatprep.subr.mxu0 0.0
      %357 = vmatpush1.msra.mxu0 0.0
      %358 = vmatprep.subr.mxu0 0.0
      %359 = vmatpush1.msra.mxu0 0.0
      %360 = vmatprep.subr.mxu0 0.0
      %361 = vmatpush1.msra.mxu0 0.0
      %362 = vmatprep.subr.mxu0 0.0
      %363 = vmatpush1.msra.mxu0 0.0
      %364 = vmatprep.subr.mxu0 0.0
      %365 = vmatpush1.msra.mxu0 0.0
      %366 = vmatprep.subr.mxu0 0.0
      %367 = vmatpush1.msra.mxu0 0.0
      %368 = vmatprep.subr.mxu0 0.0
      %369 = vmatpush1.msra.mxu0 0.0
      %370 = vmatprep.subr.mxu0 0.0
      %371 = vmatpush1.msra.mxu0 0.0
      %372 = vmatprep.subr.mxu0 0.0
      %373 = vmatpush1.msra.mxu0 0.0
      %374 = vmatprep.subr.mxu0 0.0
      %375 = vmatpush1.msra.mxu0 0.0
      %376 = vmatprep.subr.mxu0 0.0
      %377 = vmatpush1.msra.mxu0 0.0
      %378 = vmatprep.subr.mxu0 0.0
      %379 = vmatpush1.msra.mxu0 0.0
      %380 = vmatprep.subr.mxu0 0.0
      %381 = vmatpush1.msra.mxu0 0.0
      %382 = vmatprep.subr.mxu0 0.0
      %383 = vmatpush1.msra.mxu0 0.0
      %384 = vmatprep.subr.mxu0 0.0
      %385 = vmatpush1.msra.mxu0 0.0
      %386 = vmatprep.subr.mxu0 0.0
      %387 = vmatpush1.msra.mxu0 0.0
      %388 = vmatprep.subr.mxu0 0.0
      %389 = vmatpush1.msra.mxu0 0.0
      %390 = vmatprep.subr.mxu0 0.0
      %391 = vmatpush1.msra.mxu0 0.0
      %392 = vmatprep.subr.mxu0 0.0
      %393 = vmatpush1.msra.mxu0 0.0
      %394 = vmatprep.subr.mxu0 0.0
      %395 = vmatpush1.msra.mxu0 0.0
      %396 = vmatprep.subr.mxu0 0.0
      %397 = vmatpush1.msra.mxu0 0.0
      %398 = vmatprep.subr.mxu0 0.0
      %399 = vmatpush1.msra.mxu0 0.0
      %400 = vmatprep.subr.mxu0 0.0
      %401 = vmatpush1.msra.mxu0 0.0
      %402 = vmatprep.subr.mxu0 0.0
      %403 = vmatpush1.msra.mxu0 0.0
      %404 = vmatprep.subr.mxu0 0.0
      %405 = vmatpush1.msra.mxu0 0.0
      %406 = vmatprep.subr.mxu0 0.0
      %407 = vmatpush1.msra.mxu0 0.0
      %408 = vmatprep.subr.mxu0 0.0
      %409 = vmatpush1.msra.mxu0 0.0
      %410 = vmatprep.subr.mxu0 0.0
      %411 = vmatpush1.msra.mxu0 0.0
      %412 = vmatprep.subr.mxu0 0.0
      %413 = vmatpush1.msra.mxu0 0.0
      %414 = vmatprep.subr.mxu0 0.0
      %415 = vmatpush1.msra.mxu0 0.0
      %416 = vmatprep.subr.mxu0 0.0
      %417 = vmatpush1.msra.mxu0 0.0
      %418 = vmatprep.mubr.f32.mxu0 0.0
      %419 = vmatmul.mubr.f32.gmra.mrb[0].mxu0 %v352
      %v420 = vpop.f32.mrb[0].mxu0
      %v421 = vadd.f32 0.0, %v420
      %v422 = vpop.f32.mrb[0].mxu0
      %423 = vdwg.mxu0
      %v424 = vlaneseq
      %v425 = vshrl.u32 %v424, 7
      %v426 = vadd.s32 %v425, 8
      %vm427 = vcmp.eq.s32.totalorder %v425, 0
      %vm428 = vcmp.eq.s32.totalorder %v426, 0
      %431 = vrot.lane.b32.xlu0 %v342, 112
      %v432 = vpop.permute.xlu0 %431
      %433 = vrot.lane.b32.xlu0 %v347, 112
      %v434 = vpop.permute.xlu0 %433
      %v437 = vrot.slane %v432, 7
      %v438 = vrot.slane %v434, 7
      %vm439 = vcmp.lt.s32.totalorder %v425, 1
      %v440 = vsel %vm439, %v437, %v438
      %v441 = vsel %vm439, %v438, %v437
      %v442 = vlaneseq
      %v443 = vshrl.u32 %v442, 7
      %v444 = vsub.s32 0, %v443
      %v445 = vrot.slane %v421, %v444
      %448 = vrot.lane.b32.xlu0 %v441, 16
      %v449 = vpop.permute.xlu0 %448
      %450 = vrot.lane.b32.xlu0 %v440, 16
      %v451 = vpop.permute.xlu0 %450
      %v454 = vsel %vm427, %v445, %v449
      %v455 = vsel %vm428, %v445, %v451
      %vm456 = vcmp.eq.s32.totalorder %v425, 15
      %vm457 = vcmp.eq.s32.totalorder %v426, 15
      %458 = vrot.lane.b32.xlu0 %v342, 104
      %v459 = vpop.permute.xlu0 %458
      %460 = vrot.lane.b32.xlu0 %v347, 104
      %v461 = vpop.permute.xlu0 %460
      %v464 = vrot.slane %v459, 1
      %v465 = vrot.slane %v461, 1
      %vm466 = vcmp.lt.s32.totalorder %v425, 7
      %v467 = vsel %vm466, %v464, %v465
      %v468 = vsel %vm466, %v465, %v464
      %v469 = vlaneseq
      %v470 = vshrl.u32 %v469, 7
      %v471 = vsub.s32 1, %v470
      %v472 = vrot.slane %v421, %v471
      %475 = vrot.lane.b32.xlu0 %v467, 24
      %v476 = vpop.permute.xlu0 %475
      %477 = vrot.lane.b32.xlu0 %v468, 24
      %v478 = vpop.permute.xlu0 %477
      %v481 = vsel %vm456, %v472, %v476
      %v482 = vsel %vm457, %v472, %v478
      %485 = vrot.lane.b32.xlu0 %v454, 112
      %v486 = vpop.permute.xlu0 %485
      %487 = vrot.lane.b32.xlu0 %v455, 112
      %v488 = vpop.permute.xlu0 %487
      %493 = vrot.lane.b32.xlu0 %v481, 112
      %v494 = vpop.permute.xlu0 %493
      %495 = vrot.lane.b32.xlu0 %v482, 112
      %v496 = vpop.permute.xlu0 %495
      %v499 = vsel %vm268, %v486, %v494
      %v500 = vsel %vm268, %v488, %v496
      %v501 = vld [vmem:[%s3] sm:$0x1]
      %v502 = vadd.f32 %v342, %v499
      %v503 = vadd.f32 %v347, %v500
      %v505 = vlaneseq
      %v506 = vshrl.u32 %v505, 7
      %v507 = vsub.s32 0, %v506
      %v508 = vrot.slane %v501, %v507
      %v510 = vadd.f32 %v502, %v508
      %v511 = vadd.f32 %v503, %v508
      %vm512 = vcmask 130048
      %513 = vst.msk [vmem:[%s263] sm:$0xff] %vm512, %v510
      %514 = vst.msk [vmem:[%s263 + $0x8] sm:$0xff] %vm512, %v511
      %s515 = smul.u32 2, %s20
      %p516 = scmp.lt.s32.totalorder %s19, 1
      %s517 = scalar_select %p516, %s19, 1
      %p518 = scmp.lt.s32.totalorder %s515, 1
      %s519 = scalar_select %p518, %s515, 1
      %s520 = smul.addr %s517, 2
      %s521 = sadd.s32 %s519, %s520
      %s522 = smul.addr %s521, 8
      %s523 = scalar_lea.vmem %s4, %s522
      // Predicated region
      $region37: #{upsample1d.1} parent=35 // pred_check
        %p524 = pneg %p145
      $region38: #{upsample1d.1} parent=35 // pred_check_branch
        %526 = sbr.rel (%p524) target = $region40
      $region39: #{upsample1d.1} parent=35 // pred_region
        %s527 = smul.u32 2, %s20
      $region40: #{upsample1d.1} parent=35 // pred_fallthru
        _
    $region36: #{upsample1d.1} parent=5 // pred_fallthru
      _
    %p528 = scmp.le.s32.totalorder 2, %s10
    // Predicated region
    $region41: #{upsample1d.1} parent=5 // pred_check
      %p529 = pneg %p528
    $region42: #{upsample1d.1} parent=5 // pred_check_branch
      %531 = sbr.rel (%p529) target = $region44
    $region43: #{upsample1d.1} parent=5 // pred_region
      %s532 = ssub.s32 %s10, 2
      // Predicated region
      $region45: #{upsample1d.1} parent=43 // pred_check
        %p533 = pneg %p151
      $region46: #{upsample1d.1} parent=43 // pred_check_branch
        %535 = sbr.rel (%p533) target = $region48
      $region47: #{upsample1d.1} parent=43 // pred_region
        %s536 = smul.u32 2, %s22
        %p537 = scmp.lt.s32.totalorder %s21, 1
        %s538 = scalar_select %p537, %s21, 1
        %p539 = scmp.lt.s32.totalorder %s536, 1
        %s540 = scalar_select %p539, %s536, 1
        %s541 = smul.addr %s538, 2
        %s542 = sadd.s32 %s540, %s541
        %s543 = smul.addr %s542, 8
        %s544 = scalar_lea.vmem %s4, %s543
      $region48: #{upsample1d.1} parent=43 // pred_fallthru
        _
    $region44: #{upsample1d.1} parent=5 // pred_fallthru
      _
  $region6: #{upsample1d.1} parent=0 // loop_footer
    %s14 = sadd.s32 1, %s10
  $region7: #{upsample1d.1} parent=0 // loop_footer_branch
    %9 = sbr.rel target = $region3
  $region8: #{upsample1d.1} parent=0 // loop_exit
    _

</llo_original>
